<compile_context>
chip_gen: v5e
topology: v5e:2x2
jax: 0.10.0
libtpu: 0.0.40
codegen_flags: <defaults>
</compile_context>

<pallas_src>
import functools

import jax
import jax.numpy as jnp
from jax.experimental import pallas as pl
from jax.experimental.pallas import tpu as pltpu

N_OUT = 6  # fc2 output width is fixed by the module


def _round_up(n, m):
    return (n + m - 1) // m * m


def _cdiv(a, b):
    return -(-a // b)


# ----------------------------------------------------------------------------
# Pallas kernel: one (TB, num_in_p) batch tile through all four (BN-folded)
# layers.
#   x_ref : (TB, num_in_p)  activation tile (compute dtype, real input width)
#   w_ref : (4, D, D)       packed weights  (compute dtype, BN folded in)
#   b_ref : (8, D)          packed biases   (f32; rows 0..3 used)
#   o_ref : (TB, n_out_p)   narrow output tile (f32)
# ----------------------------------------------------------------------------
def _testccn2_kernel(x_ref, w_ref, b_ref, o_ref, *, num_in_p, n_out_p):
    cdt = w_ref.dtype  # bf16 halves weight/activation DMA on every generation

    # Layer 1: K = real (sublane-aligned) input width — only the first
    # num_in_p weight rows participate, no padded-lane input traffic.
    pre = jnp.dot(x_ref[...], w_ref[0, :num_in_p, :],
                  preferred_element_type=jnp.float32)
    h = jnp.tanh(pre + b_ref[0:1, :]).astype(cdt)

    for layer in (1, 2):                      # unrolled at trace time
        pre = jnp.dot(h, w_ref[layer], preferred_element_type=jnp.float32)
        # bias add + tanh in f32 (VPU/EUP); cast back only for the next MXU feed
        h = jnp.tanh(pre + b_ref[layer:layer + 1, :]).astype(cdt)

    out = jnp.dot(h, w_ref[3], preferred_element_type=jnp.float32) + b_ref[3:4, :]
    # Narrow the store to the real output columns (16x fewer HBM bytes than a
    # 128-wide slab; the masked vst stays inside VMEM and the HBM DMA is
    # contiguous because the block spans the full last dim).
    o_ref[...] = out[:, :n_out_p].astype(o_ref.dtype)


# ----------------------------------------------------------------------------
# One-time parameter packing (kept OUT of the jitted hot path).
# ----------------------------------------------------------------------------
def pack_params(params, compute_dtype=jnp.float32, eps=1e-5):
    """Take the middle conv tap, transpose to (in, out), fold each eval-mode
    BatchNorm into the following layer, zero-pad to a common 128-multiple
    width D, and pack weights -> (4, D, D), biases -> (8, D).  D stays 128
    even on v6e/v7x's 256-wide MXU: the kernel is HBM-bound, padding K/N to
    256 would only quadruple wasted DMA/MXU work on zeros."""
    w1 = jnp.transpose(params["conv1_w"][:, :, 1]).astype(jnp.float32)  # (num_in, c1)
    w2 = jnp.transpose(params["conv2_w"][:, :, 1]).astype(jnp.float32)  # (c1, c2)
    w3 = jnp.transpose(params["fc1_w"]).astype(jnp.float32)             # (c2, f1)
    w4 = jnp.transpose(params["fc2_w"]).astype(jnp.float32)             # (f1, 6)
    b1 = params["conv1_b"].astype(jnp.float32)
    b2 = params["conv2_b"].astype(jnp.float32)
    b3 = params["fc1_b"].astype(jnp.float32)
    b4 = params["fc2_b"].astype(jnp.float32)

    def bn_affine(g, b, rm, rv):
        s = g / jnp.sqrt(rv + eps)
        return s, b - rm * s

    s1, t1 = bn_affine(params["bn1_g"], params["bn1_b"],
                       params["bn1_rm"], params["bn1_rv"])
    s2, t2 = bn_affine(params["bn2_g"], params["bn2_b"],
                       params["bn2_rm"], params["bn2_rv"])
    s3, t3 = bn_affine(params["bn3_g"], params["bn3_b"],
                       params["bn3_rm"], params["bn3_rv"])

    # fold bn_k into layer k+1:  (h*s + t) @ W + b == h @ (s[:,None]*W) + (t@W + b)
    w2f, b2f = w2 * s1[:, None], b2 + t1 @ w2
    w3f, b3f = w3 * s2[:, None], b3 + t2 @ w3
    w4f, b4f = w4 * s3[:, None], b4 + t3 @ w4

    num_in, c1 = w1.shape
    c2 = w2f.shape[1]
    f1 = w3f.shape[1]
    n_out = w4f.shape[1]
    D = _round_up(max(num_in, c1, c2, f1, n_out), 128)

    W = jnp.zeros((4, D, D), jnp.float32)
    W = W.at[0, :num_in, :c1].set(w1)
    W = W.at[1, :c1, :c2].set(w2f)
    W = W.at[2, :c2, :f1].set(w3f)
    W = W.at[3, :f1, :n_out].set(w4f)

    Bv = jnp.zeros((8, D), jnp.float32)
    Bv = Bv.at[0, :c1].set(b1)
    Bv = Bv.at[1, :c2].set(b2f)
    Bv = Bv.at[2, :f1].set(b3f)
    Bv = Bv.at[3, :n_out].set(b4f)

    return {"w": W.astype(compute_dtype),   # bf16 here halves weight + act DMA
            "b": Bv}                        # biases stay f32 (post-accumulate add)


# ----------------------------------------------------------------------------
# Fused eval-mode forward.  x: (B, num_in) f32 -> (B, 6) f32.
# ----------------------------------------------------------------------------
@jax.jit
def testccn2_forward(x, packed):
    w, b = packed["w"], packed["b"]
    D = w.shape[-1]
    B, num_in = x.shape
    cdt = w.dtype

    # Sublane packing: bf16 packs 2 rows per 32-bit sublane -> align rows to 16.
    row_align = 16 if cdt == jnp.bfloat16 else 8
    num_in_p = _round_up(num_in, row_align)
    n_out_p = _round_up(N_OUT, 8)

    # Batch tiling: large tiles amortize the ~0.35 us/grid-step overhead,
    # >=2 tiles for non-trivial B so v7x's 2 TensorCores both get work, and
    # TB minimizes Bpad-B (no near-2x pad at unlucky B).
    TB_MAX = 1024
    n_tiles = max(_cdiv(B, TB_MAX), 2 if B >= 256 else 1)
    TB = _round_up(_cdiv(B, n_tiles), row_align)
    Bpad = n_tiles * TB

    # One small pad/cast at the REAL input width (B*num_in bytes, not B*128);
    # skipped entirely when already aligned.  Padded rows/cols are zero and
    # pass harmlessly through zero weight rows / get sliced off below.
    if Bpad == B and num_in_p == num_in and x.dtype == cdt:
        xp = x
    else:
        xp = jnp.zeros((Bpad, num_in_p), cdt).at[:B, :num_in].set(x.astype(cdt))

    itemsize = w.dtype.itemsize
    cost = pl.CostEstimate(
        flops=2 * Bpad * D * (num_in_p + 2 * D + N_OUT),
        transcendentals=3 * Bpad * D,
        bytes_accessed=(Bpad * num_in_p * itemsize        # input tiles
                        + 4 * D * D * itemsize            # packed weights
                        + 8 * D * 4                       # packed biases
                        + Bpad * n_out_p * 4))            # narrow output

    out = pl.pallas_call(
        functools.partial(_testccn2_kernel, num_in_p=num_in_p, n_out_p=n_out_p),
        out_shape=jax.ShapeDtypeStruct((Bpad, n_out_p), jnp.float32),
        grid=(n_tiles,),
        in_specs=[
            pl.BlockSpec((TB, num_in_p), lambda i: (i, 0)),   # x: batch-tiled, real width
            pl.BlockSpec((4, D, D), lambda i: (0, 0, 0)),     # weights: VMEM resident
            pl.BlockSpec((8, D), lambda i: (0, 0)),           # biases:  VMEM resident
        ],
        out_specs=pl.BlockSpec((TB, n_out_p), lambda i: (i, 0)),  # narrow output
        compiler_params=pltpu.CompilerParams(
            dimension_semantics=("parallel",)),               # shards on v7x's 2 TCs
        cost_estimate=cost,
    )(xp, w, b)

    return out[:B, :N_OUT]   # fc2 has 6 outputs


# ----------------------------------------------------------------------------
# Deterministic parameter construction (mirrors the module __init__ shapes).
# ----------------------------------------------------------------------------
def make_params(key, num_in, cnn1_out, cnn2_out, fc1_out, n_out=N_OUT):
    ks = jax.random.split(key, 12)

    def xavier(k, shape, fan_in, fan_out):
        limit = jnp.sqrt(6.0 / (fan_in + fan_out))
        return jax.random.uniform(k, shape, jnp.float32, -limit, limit)

    return {
        "conv1_w": xavier(ks[0], (cnn1_out, num_in, 3), num_in * 3, cnn1_out * 3),
        "conv1_b": jnp.full((cnn1_out,), 0.001, jnp.float32),
        "conv2_w": xavier(ks[1], (cnn2_out, cnn1_out, 3), cnn1_out * 3, cnn2_out * 3),
        "conv2_b": jnp.full((cnn2_out,), 0.001, jnp.float32),
        "fc1_w": xavier(ks[2], (fc1_out, cnn2_out), cnn2_out, fc1_out),
        "fc1_b": jnp.full((fc1_out,), 0.001, jnp.float32),
        "fc2_w": xavier(ks[3], (n_out, fc1_out), fc1_out, n_out),
        "fc2_b": jnp.full((n_out,), 0.001, jnp.float32),
        "bn1_g": 1.0 + 0.1 * jax.random.normal(ks[4], (cnn1_out,), jnp.float32),
        "bn1_b": 0.05 * jax.random.normal(ks[5], (cnn1_out,), jnp.float32),
        "bn1_rm": 0.1 * jax.random.normal(ks[6], (cnn1_out,), jnp.float32),
        "bn1_rv": 0.9 + 0.1 * jax.random.uniform(ks[7], (cnn1_out,), jnp.float32),
        "bn2_g": 1.0 + 0.1 * jax.random.normal(ks[8], (cnn2_out,), jnp.float32),
        "bn2_b": 0.05 * jax.random.normal(ks[9], (cnn2_out,), jnp.float32),
        "bn2_rm": 0.1 * jax.random.normal(ks[10], (cnn2_out,), jnp.float32),
        "bn2_rv": 0.9 + 0.1 * jax.random.uniform(ks[11], (cnn2_out,), jnp.float32),
        "bn3_g": jnp.linspace(0.9, 1.1, fc1_out, dtype=jnp.float32),
        "bn3_b": jnp.linspace(-0.05, 0.05, fc1_out, dtype=jnp.float32),
        "bn3_rm": jnp.linspace(-0.1, 0.1, fc1_out, dtype=jnp.float32),
        "bn3_rv": jnp.linspace(0.9, 1.1, fc1_out, dtype=jnp.float32),
    }


# ----------------------------------------------------------------------------
# Pure-JAX reference (unfolded eval-mode math) for validation.
# ----------------------------------------------------------------------------
def reference_forward(x, params, eps=1e-5):
    def bn(h, g, b, rm, rv):
        return (h - rm) / jnp.sqrt(rv + eps) * g + b

    h1 = jnp.tanh(x @ params["conv1_w"][:, :, 1].T + params["conv1_b"])
    h1 = bn(h1, params["bn1_g"], params["bn1_b"], params["bn1_rm"], params["bn1_rv"])
    h2 = jnp.tanh(h1 @ params["conv2_w"][:, :, 1].T + params["conv2_b"])
    h2 = bn(h2, params["bn2_g"], params["bn2_b"], params["bn2_rm"], params["bn2_rv"])
    h3 = jnp.tanh(h2 @ params["fc1_w"].T + params["fc1_b"])
    h3 = bn(h3, params["bn3_g"], params["bn3_b"], params["bn3_rm"], params["bn3_rv"])
    return h3 @ params["fc2_w"].T + params["fc2_b"]


if __name__ == "__main__":
    num_in, cnn1_out, cnn2_out, fc1_out = 16, 32, 32, 32

    key = jax.random.PRNGKey(0)
    kx, kx2, kp = jax.random.split(key, 3)
    params = make_params(kp, num_in, cnn1_out, cnn2_out, fc1_out)
    packed_f32 = pack_params(params, compute_dtype=jnp.float32)
    packed_bf16 = pack_params(params, compute_dtype=jnp.bfloat16)

    # --- Case 1: small batch, deliberately not a multiple of 8 (pad path). ---
    B = 10
    x = jax.random.normal(kx, (B, num_in), jnp.float32)
    ref = reference_forward(x, params)

    out = jax.block_until_ready(testccn2_forward(x, packed_f32))
    assert out.shape == (B, N_OUT), out.shape
    assert jnp.allclose(out, ref, atol=1e-4, rtol=1e-4), "f32 mismatch vs reference"

    out_bf16 = jax.block_until_ready(testccn2_forward(x, packed_bf16))
    assert out_bf16.shape == (B, N_OUT), out_bf16.shape
    assert jnp.allclose(out_bf16, ref, atol=1e-1, rtol=1e-1), "bf16 mismatch vs reference"

    # --- Case 2: larger batch exercising the multi-tile (>=2 TC) grid path. ---
    B2 = 300
    x2 = jax.random.normal(kx2, (B2, num_in), jnp.float32)
    ref2 = reference_forward(x2, params)

    out2 = jax.block_until_ready(testccn2_forward(x2, packed_f32))
    assert out2.shape == (B2, N_OUT), out2.shape
    assert jnp.allclose(out2, ref2, atol=1e-4, rtol=1e-4), "f32 multi-tile mismatch"

    out2_bf16 = jax.block_until_ready(testccn2_forward(x2, packed_bf16))
    assert jnp.allclose(out2_bf16, ref2, atol=1e-1, rtol=1e-1), "bf16 multi-tile mismatch"

    print("KERNEL_OK")
</pallas_src>

<mosaic_0001>
module attributes {stable_mosaic.version = 11 : i64} {
  func.func @_testccn2_kernel(%arg0: i32, %arg1: memref<16x16xf32, #tpu.memory_space<vmem>>, %arg2: memref<4x128x128xf32, #tpu.memory_space<vmem>>, %arg3: memref<8x128xf32, #tpu.memory_space<vmem>>, %arg4: memref<16x8xf32, #tpu.memory_space<vmem>>) attributes {dimension_semantics = [#tpu.dimension_semantics<parallel>], iteration_bounds = array<i64: 1>, scalar_prefetch = 0 : i64, scratch_operands = 0 : i64, tpu.core_type = #tpu.core_type<tc>, window_params = [{transform_indices = @transform_0, window_bounds = array<i64: 16, 16>}, {pipeline_mode = #tpu.pipeline_mode<synchronous>, transform_indices = @transform_1, window_bounds = array<i64: 4, 128, 128>}, {pipeline_mode = #tpu.pipeline_mode<synchronous>, transform_indices = @transform_2, window_bounds = array<i64: 8, 128>}, {transform_indices = @transform_3, window_bounds = array<i64: 16, 8>}]} {
    %c0 = arith.constant 0 : index
    %c0_0 = arith.constant 0 : index
    %0 = vector.load %arg1[%c0, %c0_0] : memref<16x16xf32, #tpu.memory_space<vmem>>, vector<16x16xf32>
    %c0_1 = arith.constant 0 : index
    %c0_2 = arith.constant 0 : index
    %c0_3 = arith.constant 0 : index
    %1 = vector.load %arg2[%c0_1, %c0_2, %c0_3] : memref<4x128x128xf32, #tpu.memory_space<vmem>>, vector<1x16x128xf32>
    %2 = vector.shape_cast %1 : vector<1x16x128xf32> to vector<16x128xf32>
    %cst = arith.constant dense<0.000000e+00> : vector<16x128xf32>
    %3 = tpu.matmul %0, %2, %cst {dimension_numbers = #tpu.dot_dimension_numbers<[1], [0], [0], [1], [0, 0, 1, 1], [], []>} : vector<16x16xf32>, vector<16x128xf32>, vector<16x128xf32> -> vector<16x128xf32>
    %c0_4 = arith.constant 0 : index
    %c0_5 = arith.constant 0 : index
    %4 = vector.load %arg3[%c0_4, %c0_5] : memref<8x128xf32, #tpu.memory_space<vmem>>, vector<1x128xf32>
    %5 = vector.broadcast %4 : vector<1x128xf32> to vector<16x128xf32>
    %6 = arith.addf %3, %5 : vector<16x128xf32>
    %7 = math.tanh %6 : vector<16x128xf32>
    %c1 = arith.constant 1 : index
    %c0_6 = arith.constant 0 : index
    %c0_7 = arith.constant 0 : index
    %8 = vector.load %arg2[%c1, %c0_6, %c0_7] : memref<4x128x128xf32, #tpu.memory_space<vmem>>, vector<1x128x128xf32>
    %9 = vector.shape_cast %8 : vector<1x128x128xf32> to vector<128x128xf32>
    %cst_8 = arith.constant dense<0.000000e+00> : vector<16x128xf32>
    %10 = tpu.matmul %7, %9, %cst_8 {dimension_numbers = #tpu.dot_dimension_numbers<[1], [0], [0], [1], [0, 0, 1, 1], [], []>} : vector<16x128xf32>, vector<128x128xf32>, vector<16x128xf32> -> vector<16x128xf32>
    %c1_9 = arith.constant 1 : index
    %c0_10 = arith.constant 0 : index
    %11 = vector.load %arg3[%c1_9, %c0_10] : memref<8x128xf32, #tpu.memory_space<vmem>>, vector<1x128xf32>
    %12 = vector.broadcast %11 : vector<1x128xf32> to vector<16x128xf32>
    %13 = arith.addf %10, %12 : vector<16x128xf32>
    %14 = math.tanh %13 : vector<16x128xf32>
    %c2 = arith.constant 2 : index
    %c0_11 = arith.constant 0 : index
    %c0_12 = arith.constant 0 : index
    %15 = vector.load %arg2[%c2, %c0_11, %c0_12] : memref<4x128x128xf32, #tpu.memory_space<vmem>>, vector<1x128x128xf32>
    %16 = vector.shape_cast %15 : vector<1x128x128xf32> to vector<128x128xf32>
    %cst_13 = arith.constant dense<0.000000e+00> : vector<16x128xf32>
    %17 = tpu.matmul %14, %16, %cst_13 {dimension_numbers = #tpu.dot_dimension_numbers<[1], [0], [0], [1], [0, 0, 1, 1], [], []>} : vector<16x128xf32>, vector<128x128xf32>, vector<16x128xf32> -> vector<16x128xf32>
    %c2_14 = arith.constant 2 : index
    %c0_15 = arith.constant 0 : index
    %18 = vector.load %arg3[%c2_14, %c0_15] : memref<8x128xf32, #tpu.memory_space<vmem>>, vector<1x128xf32>
    %19 = vector.broadcast %18 : vector<1x128xf32> to vector<16x128xf32>
    %20 = arith.addf %17, %19 : vector<16x128xf32>
    %21 = math.tanh %20 : vector<16x128xf32>
    %c3 = arith.constant 3 : index
    %c0_16 = arith.constant 0 : index
    %c0_17 = arith.constant 0 : index
    %22 = vector.load %arg2[%c3, %c0_16, %c0_17] : memref<4x128x128xf32, #tpu.memory_space<vmem>>, vector<1x128x128xf32>
    %23 = vector.shape_cast %22 : vector<1x128x128xf32> to vector<128x128xf32>
    %cst_18 = arith.constant dense<0.000000e+00> : vector<16x128xf32>
    %24 = tpu.matmul %21, %23, %cst_18 {dimension_numbers = #tpu.dot_dimension_numbers<[1], [0], [0], [1], [0, 0, 1, 1], [], []>} : vector<16x128xf32>, vector<128x128xf32>, vector<16x128xf32> -> vector<16x128xf32>
    %c3_19 = arith.constant 3 : index
    %c0_20 = arith.constant 0 : index
    %25 = vector.load %arg3[%c3_19, %c0_20] : memref<8x128xf32, #tpu.memory_space<vmem>>, vector<1x128xf32>
    %26 = vector.broadcast %25 : vector<1x128xf32> to vector<16x128xf32>
    %27 = arith.addf %24, %26 : vector<16x128xf32>
    %28 = vector.extract_strided_slice %27 {offsets = [0, 0], sizes = [16, 8], strides = [1, 1]} : vector<16x128xf32> to vector<16x8xf32>
    %c0_21 = arith.constant 0 : index
    %c0_22 = arith.constant 0 : index
    %29 = vector.load %arg4[%c0_21, %c0_22] : memref<16x8xf32, #tpu.memory_space<vmem>>, vector<16x8xf32>
    tpu.vector_store %arg4[%c0_21, %c0_22], %28 {strides = array<i32>} : memref<16x8xf32, #tpu.memory_space<vmem>>, vector<16x8xf32>,
    return
  }
  func.func @transform_0(%arg0: i32) -> (i32, i32) {
    %c0_i32 = arith.constant 0 : i32
    %c0_i32_0 = arith.constant 0 : i32
    return %arg0, %c0_i32 : i32, i32
  }
  func.func @transform_1(%arg0: i32) -> (i32, i32, i32) {
    %c0_i32 = arith.constant 0 : i32
    %c0_i32_0 = arith.constant 0 : i32
    %c0_i32_1 = arith.constant 0 : i32
    %c0_i32_2 = arith.constant 0 : i32
    return %c0_i32, %c0_i32_0, %c0_i32_1 : i32, i32, i32
  }
  func.func @transform_2(%arg0: i32) -> (i32, i32) {
    %c0_i32 = arith.constant 0 : i32
    %c0_i32_0 = arith.constant 0 : i32
    %c0_i32_1 = arith.constant 0 : i32
    return %c0_i32, %c0_i32_0 : i32, i32
  }
  func.func @transform_3(%arg0: i32) -> (i32, i32) {
    %c0_i32 = arith.constant 0 : i32
    %c0_i32_0 = arith.constant 0 : i32
    return %arg0, %c0_i32 : i32, i32
  }
}

</mosaic_0001>

<llo_original>
// kernel: testccn2_forward.1
$region0: #{testccn2_forward.1}
  #allocation0 [shape = 'u32[]', space=smem, size = 0x4, offset = 0x4, fixed_abs, tag = 'smem constant byte address 0x4 - core index']
  #allocation1 [shape = 'u32[72,128]{1,0:T(1,128)}', space=vmem, size = 0x9000, scoped, tag = 'internal scratch']
  %s0 = inlined_call_operand.vmem [shape: f32[16,16], index: 0, kind: input, shape index: {}]
  %s1 = inlined_call_operand.hbm [shape: f32[4,128,128], index: 1, kind: input, shape index: {}]
  %s2 = inlined_call_operand.vmem [shape: f32[8,128], index: 2, kind: input, shape index: {}]
  %s3 = inlined_call_operand.vmem [shape: f32[16,8], index: 3, kind: output, shape index: {}]
  %s4 = sld [smem:[#allocation0]]
  $region26: #{testccn2_forward.1} parent=0
    _
  %s6 = ssub.s32 1, %s4
  %s7 = scalar_select 0, %s6, %s4
  $region1: #{testccn2_forward.1} parent=0
    #allocation2 [shape = 'u8[262144]{0}', space=vmem, size = 0x40000, scoped, tag = 'input window, operand 1, single buffered']
    #allocation3 [shape = 's32[1]{0}', space=sflag, size = 0x4, scoped, tag = 'scoped memory for testccn2_forward.1']
    %8 = vsyncpa [#allocation3], 0
    // Predicated region
    $region2: #{testccn2_forward.1} parent=1 // pred_check
      _
    $region3: #{testccn2_forward.1} parent=1 // pred_check_branch
      %10 = sbr.rel (0) target = $region5
    $region4: #{testccn2_forward.1} parent=1 // pred_region
      _
    $region5: #{testccn2_forward.1} parent=1 // pred_fallthru
      _
    // Predicated region
    $region6: #{testccn2_forward.1} parent=1 // pred_check
      _
    $region7: #{testccn2_forward.1} parent=1 // pred_check_branch
      %12 = sbr.rel (0) target = $region9
    $region8: #{testccn2_forward.1} parent=1 // pred_region
      %14 = vsyncadd [#allocation3], 0
      %s15 = sshll.u32 %s1, 4
      %s16 = int_to_ptr.hbm [resolvable:$true] %s15
      %s17 = sshll.u32 [#allocation2], 4
      %s18 = int_to_ptr.vmem [resolvable:$true] %s17
      %23 = dma.hbm_to_vmem [thread:$0]  %s16, 8192, %s18, [#allocation3], 128, 128, 8
    $region9: #{testccn2_forward.1} parent=1 // pred_fallthru
      _
    // Predicated region
    $region10: #{testccn2_forward.1} parent=1 // pred_check
      _
    $region11: #{testccn2_forward.1} parent=1 // pred_check_branch
      %25 = sbr.rel (0) target = $region13
    $region12: #{testccn2_forward.1} parent=1 // pred_region
      _
    $region13: #{testccn2_forward.1} parent=1 // pred_fallthru
      _
    // Predicated region
    $region14: #{testccn2_forward.1} parent=1 // pred_check
      _
    $region15: #{testccn2_forward.1} parent=1 // pred_check_branch
      %27 = sbr.rel (0) target = $region17
    $region16: #{testccn2_forward.1} parent=1 // pred_region
      %29 = dma.done [#allocation3], 8192
    $region17: #{testccn2_forward.1} parent=1 // pred_fallthru
      _
    %v30 = vld [vmem:[%s0] sm:$0xff]
    %v31 = vld [vmem:[%s0 + $0x8] sm:$0xff]
    %v32 = vld [vmem:[#allocation2] sm:$0xff]
    %v33 = vld [vmem:[#allocation2 + $0x8] sm:$0xff]
    %v34 = vld [vmem:[%s2] sm:$0x1]
    %v35 = vperm.slane %v34, 0
    %vm36 = vcmask 130048
    %v38 = vsel %vm36, %v30, 0
    %v41 = vsel %vm36, %v31, 0
    %43 = vmatpush.msra.mxu0 0.0
    %44 = vmatpush.msra.mxu0 0.0
    %45 = vmatpush.msra.mxu0 0.0
    %46 = vmatpush.msra.mxu0 0.0
    %47 = vmatpush.msra.mxu0 0.0
    %48 = vmatpush.msra.mxu0 0.0
    %49 = vmatpush.msra.mxu0 0.0
    %50 = vmatpush.msra.mxu0 0.0
    %51 = vmatpush.msra.mxu0 0.0
    %52 = vmatpush.msra.mxu0 0.0
    %53 = vmatpush.msra.mxu0 0.0
    %54 = vmatpush.msra.mxu0 0.0
    %55 = vmatpush.msra.mxu0 0.0
    %56 = vmatpush.msra.mxu0 0.0
    %57 = vmatpush.msra.mxu0 %v33
    %58 = vmatpush.msra.mxu0 %v32
    %59 = vmatmul.f32.gmra.mxu0 %v38
    %v60 = vpop.f32.mrf.mxu0
    %v61 = vadd.f32 %v35, %v60
    %62 = vmatmul.f32.gmra.mxu0 %v41
    %v63 = vpop.f32.mrf.mxu0
    %v64 = vadd.f32 %v35, %v63
    %65 = vdwg.mxu0
    %v66 = vtanh.pop %v61
    %v67 = vtanh.pop %v64
    %s68 = scalar_lea.vmem [#allocation2], 128
    %v69 = vld [vmem:[%s68] sm:$0xff]
    %v70 = vld [vmem:[%s68 + $0x8] sm:$0xff]
    %v71 = vld [vmem:[%s68 + $0x10] sm:$0xff]
    %v72 = vld [vmem:[%s68 + $0x18] sm:$0xff]
    %v73 = vld [vmem:[%s68 + $0x20] sm:$0xff]
    %v74 = vld [vmem:[%s68 + $0x28] sm:$0xff]
    %v75 = vld [vmem:[%s68 + $0x30] sm:$0xff]
    %v76 = vld [vmem:[%s68 + $0x38] sm:$0xff]
    %v77 = vld [vmem:[%s68 + $0x40] sm:$0xff]
    %v78 = vld [vmem:[%s68 + $0x48] sm:$0xff]
    %v79 = vld [vmem:[%s68 + $0x50] sm:$0xff]
    %v80 = vld [vmem:[%s68 + $0x58] sm:$0xff]
    %v81 = vld [vmem:[%s68 + $0x60] sm:$0xff]
    %v82 = vld [vmem:[%s68 + $0x68] sm:$0xff]
    %v83 = vld [vmem:[%s68 + $0x70] sm:$0xff]
    %v84 = vld [vmem:[%s68 + $0x78] sm:$0xff]
    %v85 = vld [vmem:[%s2 + $0x1] sm:$0x1]
    %v86 = vperm.slane %v85, 0
    %87 = vmatpush.msra.mxu0 %v84
    %88 = vmatpush.msra.mxu0 %v83
    %89 = vmatpush.msra.mxu0 %v82
    %90 = vmatpush.msra.mxu0 %v81
    %91 = vmatpush.msra.mxu0 %v80
    %92 = vmatpush.msra.mxu0 %v79
    %93 = vmatpush.msra.mxu0 %v78
    %94 = vmatpush.msra.mxu0 %v77
    %95 = vmatpush.msra.mxu0 %v76
    %96 = vmatpush.msra.mxu0 %v75
    %97 = vmatpush.msra.mxu0 %v74
    %98 = vmatpush.msra.mxu0 %v73
    %99 = vmatpush.msra.mxu0 %v72
    %100 = vmatpush.msra.mxu0 %v71
    %101 = vmatpush.msra.mxu0 %v70
    %102 = vmatpush.msra.mxu0 %v69
    %103 = vmatmul.f32.gmra.mxu0 %v66
    %v104 = vpop.f32.mrf.mxu0
    %v105 = vadd.f32 %v86, %v104
    %106 = vmatmul.f32.gmra.mxu0 %v67
    %v107 = vpop.f32.mrf.mxu0
    %v108 = vadd.f32 %v86, %v107
    %109 = vdwg.mxu0
    %v110 = vtanh.pop %v105
    %v111 = vtanh.pop %v108
    %s112 = scalar_lea.vmem [#allocation2], 256
    %v113 = vld [vmem:[%s112] sm:$0xff]
    %v114 = vld [vmem:[%s112 + $0x8] sm:$0xff]
    %v115 = vld [vmem:[%s112 + $0x10] sm:$0xff]
    %v116 = vld [vmem:[%s112 + $0x18] sm:$0xff]
    %v117 = vld [vmem:[%s112 + $0x20] sm:$0xff]
    %v118 = vld [vmem:[%s112 + $0x28] sm:$0xff]
    %v119 = vld [vmem:[%s112 + $0x30] sm:$0xff]
    %v120 = vld [vmem:[%s112 + $0x38] sm:$0xff]
    %v121 = vld [vmem:[%s112 + $0x40] sm:$0xff]
    %v122 = vld [vmem:[%s112 + $0x48] sm:$0xff]
    %v123 = vld [vmem:[%s112 + $0x50] sm:$0xff]
    %v124 = vld [vmem:[%s112 + $0x58] sm:$0xff]
    %v125 = vld [vmem:[%s112 + $0x60] sm:$0xff]
    %v126 = vld [vmem:[%s112 + $0x68] sm:$0xff]
    %v127 = vld [vmem:[%s112 + $0x70] sm:$0xff]
    %v128 = vld [vmem:[%s112 + $0x78] sm:$0xff]
    %v129 = vld [vmem:[%s2 + $0x2] sm:$0x1]
    %v130 = vperm.slane %v129, 0
    %131 = vmatpush.msra.mxu0 %v128
    %132 = vmatpush.msra.mxu0 %v127
    %133 = vmatpush.msra.mxu0 %v126
    %134 = vmatpush.msra.mxu0 %v125
    %135 = vmatpush.msra.mxu0 %v124
    %136 = vmatpush.msra.mxu0 %v123
    %137 = vmatpush.msra.mxu0 %v122
    %138 = vmatpush.msra.mxu0 %v121
    %139 = vmatpush.msra.mxu0 %v120
    %140 = vmatpush.msra.mxu0 %v119
    %141 = vmatpush.msra.mxu0 %v118
    %142 = vmatpush.msra.mxu0 %v117
    %143 = vmatpush.msra.mxu0 %v116
    %144 = vmatpush.msra.mxu0 %v115
    %145 = vmatpush.msra.mxu0 %v114
    %146 = vmatpush.msra.mxu0 %v113
    %147 = vmatmul.f32.gmra.mxu0 %v110
    %v148 = vpop.f32.mrf.mxu0
    %v149 = vadd.f32 %v130, %v148
    %150 = vmatmul.f32.gmra.mxu0 %v111
    %v151 = vpop.f32.mrf.mxu0
    %v152 = vadd.f32 %v130, %v151
    %153 = vdwg.mxu0
    %v154 = vtanh.pop %v149
    %v155 = vtanh.pop %v152
    %s156 = scalar_lea.vmem [#allocation2], 384
    %v157 = vld [vmem:[%s156] sm:$0xff]
    %v158 = vld [vmem:[%s156 + $0x8] sm:$0xff]
    %v159 = vld [vmem:[%s156 + $0x10] sm:$0xff]
    %v160 = vld [vmem:[%s156 + $0x18] sm:$0xff]
    %v161 = vld [vmem:[%s156 + $0x20] sm:$0xff]
    %v162 = vld [vmem:[%s156 + $0x28] sm:$0xff]
    %v163 = vld [vmem:[%s156 + $0x30] sm:$0xff]
    %v164 = vld [vmem:[%s156 + $0x38] sm:$0xff]
    %v165 = vld [vmem:[%s156 + $0x40] sm:$0xff]
    %v166 = vld [vmem:[%s156 + $0x48] sm:$0xff]
    %v167 = vld [vmem:[%s156 + $0x50] sm:$0xff]
    %v168 = vld [vmem:[%s156 + $0x58] sm:$0xff]
    %v169 = vld [vmem:[%s156 + $0x60] sm:$0xff]
    %v170 = vld [vmem:[%s156 + $0x68] sm:$0xff]
    %v171 = vld [vmem:[%s156 + $0x70] sm:$0xff]
    %v172 = vld [vmem:[%s156 + $0x78] sm:$0xff]
    %v173 = vld [vmem:[%s2 + $0x3] sm:$0x1]
    %v174 = vperm.slane %v173, 0
    %175 = vmatpush.msra.mxu0 %v172
    %176 = vmatpush.msra.mxu0 %v171
    %177 = vmatpush.msra.mxu0 %v170
    %178 = vmatpush.msra.mxu0 %v169
    %179 = vmatpush.msra.mxu0 %v168
    %180 = vmatpush.msra.mxu0 %v167
    %181 = vmatpush.msra.mxu0 %v166
    %182 = vmatpush.msra.mxu0 %v165
    %183 = vmatpush.msra.mxu0 %v164
    %184 = vmatpush.msra.mxu0 %v163
    %185 = vmatpush.msra.mxu0 %v162
    %186 = vmatpush.msra.mxu0 %v161
    %187 = vmatpush.msra.mxu0 %v160
    %188 = vmatpush.msra.mxu0 %v159
    %189 = vmatpush.msra.mxu0 %v158
    %190 = vmatpush.msra.mxu0 %v157
    %191 = vmatmul.f32.gmra.mxu0 %v154
    %v192 = vpop.f32.mrf.mxu0
    %v193 = vadd.f32 %v174, %v192
    %194 = vmatmul.f32.gmra.mxu0 %v155
    %v195 = vpop.f32.mrf.mxu0
    %v196 = vadd.f32 %v174, %v195
    %197 = vdwg.mxu0
    %vm198 = vcmask 64512
    %199 = vst.msk [vmem:[%s3] sm:$0xff] %vm198, %v193
    %200 = vst.msk [vmem:[%s3 + $0x8] sm:$0xff] %vm198, %v196
    // Predicated region
    $region18: #{testccn2_forward.1} parent=1 // pred_check
      _
    $region19: #{testccn2_forward.1} parent=1 // pred_check_branch
      %202 = sbr.rel (0) target = $region21
    $region20: #{testccn2_forward.1} parent=1 // pred_region
      _
    $region21: #{testccn2_forward.1} parent=1 // pred_fallthru
      _
    // Predicated region
    $region22: #{testccn2_forward.1} parent=1 // pred_check
      _
    $region23: #{testccn2_forward.1} parent=1 // pred_check_branch
      %204 = sbr.rel (0) target = $region25
    $region24: #{testccn2_forward.1} parent=1 // pred_region
      _
    $region25: #{testccn2_forward.1} parent=1 // pred_fallthru
      _
    %205 = vsyncpa [#allocation3], 1

</llo_original>
